<compile_context>
chip_gen: v7x
topology: tpu7x:2x2x1
jax: 0.10.0
libtpu: 0.0.40
codegen_flags: <defaults>
</compile_context>

<pallas_src>
import functools

import jax
import jax.numpy as jnp
from jax.experimental import pallas as pl
from jax.experimental.pallas import tpu as pltpu


def _round_up(x, m):
    return (x + m - 1) // m * m


def _cdiv(a, b):
    return -(-a // b)


# ----------------------------- tile planning --------------------------------

_TK_CAP = 2560  # double-buffered bf16 B tiles stay ~<= 2.5 MiB -> fits every gen's VMEM


def _plan(M, K, N):
    """Adaptive tile plan for an [M,K]x[K,N] matmul (bf16 operands)."""
    tm = min(128, _round_up(max(M, 1), 16))          # 16: bf16 sublane packing
    tn = min(512, _round_up(N, 128))
    kp0 = _round_up(K, 128)
    nk = _cdiv(kp0, _TK_CAP)
    tk = _round_up(_cdiv(kp0, nk), 128)
    return dict(M=M, K=K, N=N, tm=tm, tn=tn, tk=tk,
                Mp=_round_up(M, tm), Kp=tk * nk, Np=_round_up(N, tn))


# ----------------------------- Pallas kernels -------------------------------


def _mm_kernel(a_ref, b_ref, bias_ref, o_ref, sum_ref, sq_ref, acc_ref, *, act):
    """bf16 matmul, f32 accumulation, fused bias (+ optional sigmoid) and
    per-channel sum / sum-of-squares epilogue for BatchNorm statistics."""
    @pl.when(pl.program_id(2) == 0)
    def _():
        acc_ref[...] = jnp.zeros_like(acc_ref)

    acc_ref[...] += jnp.dot(a_ref[...], b_ref[...],
                            preferred_element_type=jnp.float32)

    @pl.when(pl.program_id(2) == pl.num_programs(2) - 1)
    def _():
        y = acc_ref[...] + bias_ref[...]
        # Per-channel partial sums for BN.  Padded M-rows are exactly zero here
        # (conv bias is folded to zero for BN layers), so they contribute nothing.
        sum_ref[...] = jnp.broadcast_to(jnp.sum(y, axis=0, keepdims=True),
                                        sum_ref.shape)
        sq_ref[...] = jnp.broadcast_to(jnp.sum(y * y, axis=0, keepdims=True),
                                       sq_ref.shape)
        if act == "sigmoid":
            y = 1.0 / (1.0 + jnp.exp(-y))
        o_ref[...] = y.astype(o_ref.dtype)


def matmul_fused(a, b_packed, bias_packed, plan, act=None):
    """a: [M,K] f32, b_packed: [Kp,Np] bf16 (pre-padded), bias_packed: [1,Np] f32.
    Returns (out[M,N] f32, per-channel sum[N], per-channel sum-of-squares[N])."""
    M, K, N = plan["M"], plan["K"], plan["N"]
    tm, tn, tk = plan["tm"], plan["tn"], plan["tk"]
    Mp, Kp, Np = plan["Mp"], plan["Kp"], plan["Np"]
    a_p = jnp.pad(a.astype(jnp.bfloat16), ((0, Mp - M), (0, Kp - K)))
    gm, gn, gk = Mp // tm, Np // tn, Kp // tk
    out, s, ss = pl.pallas_call(
        functools.partial(_mm_kernel, act=act),
        out_shape=(jax.ShapeDtypeStruct((Mp, Np), jnp.float32),
                   jax.ShapeDtypeStruct((8 * gm, Np), jnp.float32),
                   jax.ShapeDtypeStruct((8 * gm, Np), jnp.float32)),
        grid_spec=pltpu.PrefetchScalarGridSpec(
            num_scalar_prefetch=0,
            grid=(gm, gn, gk),
            in_specs=[pl.BlockSpec((tm, tk), lambda i, j, k: (i, k)),
                      pl.BlockSpec((tk, tn), lambda i, j, k: (k, j)),
                      pl.BlockSpec((1, tn), lambda i, j, k: (0, j))],
            out_specs=(pl.BlockSpec((tm, tn), lambda i, j, k: (i, j)),
                       pl.BlockSpec((8, tn), lambda i, j, k: (i, j)),
                       pl.BlockSpec((8, tn), lambda i, j, k: (i, j))),
            scratch_shapes=[pltpu.VMEM((tm, tn), jnp.float32)]),
        compiler_params=pltpu.CompilerParams(
            dimension_semantics=("parallel", "parallel", "arbitrary")),
    )(a_p, b_packed, bias_packed)
    ch_sum = jnp.sum(s[0::8, :N], axis=0)
    ch_sq = jnp.sum(ss[0::8, :N], axis=0)
    return out[:M, :N], ch_sum, ch_sq


def _affine_act_kernel(x_ref, scale_ref, shift_ref, o_ref, *, act):
    y = x_ref[...] * scale_ref[...] + shift_ref[...]
    if act == "relu":
        y = jnp.maximum(y, 0.0)
    elif act == "leaky_relu":
        y = jnp.where(y >= 0.0, y, 0.01 * y)
    o_ref[...] = y.astype(o_ref.dtype)


def affine_act(x, scale, shift, act):
    """y = act(x * scale + shift) per channel.  x: [M, C]; scale/shift: [C]."""
    M, C = x.shape
    tm = min(128, _round_up(M, 8))
    Mp, Cp = _round_up(M, tm), _round_up(C, 128)
    x_p = jnp.pad(x, ((0, Mp - M), (0, Cp - C)))
    sc = jnp.pad(scale.reshape(1, C), ((0, 0), (0, Cp - C)))
    sh = jnp.pad(shift.reshape(1, C), ((0, 0), (0, Cp - C)))
    out = pl.pallas_call(
        functools.partial(_affine_act_kernel, act=act),
        out_shape=jax.ShapeDtypeStruct((Mp, Cp), jnp.float32),
        grid_spec=pltpu.PrefetchScalarGridSpec(
            num_scalar_prefetch=0,
            grid=(Mp // tm,),
            in_specs=[pl.BlockSpec((tm, Cp), lambda i: (i, 0)),
                      pl.BlockSpec((1, Cp), lambda i: (0, 0)),
                      pl.BlockSpec((1, Cp), lambda i: (0, 0))],
            out_specs=pl.BlockSpec((tm, Cp), lambda i: (i, 0))),
        compiler_params=pltpu.CompilerParams(
            dimension_semantics=("parallel",)),
    )(x_p, sc, sh)
    return out[:M, :C]


# ------------------------- conv lowering (JAX glue) --------------------------


def _im2col3d(x, k, stride, taps):
    """x: [N,D,H,W,C] (already padded/dilated) -> cols [N*Do*Ho*Wo, ntaps*C]."""
    N, D, H, W, C = x.shape
    Do = (D - k) // stride + 1
    Ho = (H - k) // stride + 1
    Wo = (W - k) // stride + 1
    patches = [x[:, kd:kd + stride * Do:stride,
                 kh:kh + stride * Ho:stride,
                 kw:kw + stride * Wo:stride, :] for (kd, kh, kw) in taps]
    cols = jnp.stack(patches, axis=4)            # [N,Do,Ho,Wo,ntaps,C]
    return cols.reshape(N * Do * Ho * Wo, len(taps) * C), (N, Do, Ho, Wo)


def _pad2(x, rows, cols):
    return jnp.pad(x, ((0, rows - x.shape[0]), (0, cols - x.shape[1])))


def _kept_offsets(in_size, k, stride, pad, out_pad):
    """Per-dimension kernel offsets of the equivalent stride-1 conv (on the
    zero-dilated, zero-padded input) that can ever touch a real input value."""
    dil = (in_size - 1) * stride + 1
    lo = k - 1 - pad
    hi = k - 1 - pad + out_pad
    out = dil + lo + hi - k + 1
    keep = [t for t in range(k)
            if any(lo <= o + t < lo + dil and (o + t - lo) % stride == 0
                   for o in range(out))]
    return keep, out


def _prep_conv(w, b, bn, act, stride, pad, in_sp, batch):
    """Pack a PyTorch Conv3d layer (w: [Cout,Cin,k,k,k]) for the fused matmul."""
    cout, cin, k = int(w.shape[0]), int(w.shape[1]), int(w.shape[-1])
    out_sp = tuple((s + 2 * pad - k) // stride + 1 for s in in_sp)
    taps = [(a, c, d) for a in range(k) for c in range(k) for d in range(k)]
    M = batch * out_sp[0] * out_sp[1] * out_sp[2]
    plan = _plan(M, len(taps) * cin, cout)
    wm = jnp.transpose(w, (2, 3, 4, 1, 0)).reshape(len(taps) * cin, cout)
    if bn is not None:
        b = jnp.zeros_like(b)   # conv bias cancels exactly under training-mode BN
    layer = dict(kind="conv", k=k, stride=stride, pad=pad, taps=taps, cout=cout,
                 plan=plan, bn=bn, act=act,
                 b_packed=_pad2(wm.astype(jnp.bfloat16), plan["Kp"], plan["Np"]),
                 bias_packed=_pad2(b.reshape(1, cout).astype(jnp.float32),
                                   1, plan["Np"]))
    return layer, out_sp


def _prep_convT(w, b, bn, act, stride, pad, out_pad, in_sp, batch):
    """Pack a PyTorch ConvTranspose3d layer (w: [Cin,Cout,k,k,k]): rewritten as a
    stride-1 conv on the dilated+padded input, keeping only taps that can ever
    sample real data (drops 26/27 taps for up1, 19/27 for up2)."""
    cin, cout, k = int(w.shape[0]), int(w.shape[1]), int(w.shape[-1])
    keeps, out_sp = [], []
    for s in in_sp:
        kp, o = _kept_offsets(s, k, stride, pad, out_pad)
        keeps.append(kp)
        out_sp.append(o)
    taps = [(a, c, d) for a in keeps[0] for c in keeps[1] for d in keeps[2]]
    M = batch * out_sp[0] * out_sp[1] * out_sp[2]
    plan = _plan(M, len(taps) * cin, cout)
    # Equivalent conv weight for tap (a,c,d) is the spatially-flipped transpose
    # kernel: w[ci, co, k-1-a, k-1-c, k-1-d]  (shape [Cin, Cout] per tap).
    wm = jnp.stack([w[:, :, k - 1 - a, k - 1 - c, k - 1 - d] for (a, c, d) in taps],
                   axis=0).reshape(len(taps) * cin, cout)
    if bn is not None:
        b = jnp.zeros_like(b)
    layer = dict(kind="convT", k=k, stride=stride, lo=k - 1 - pad,
                 hi=k - 1 - pad + out_pad, taps=taps, cout=cout,
                 plan=plan, bn=bn, act=act,
                 b_packed=_pad2(wm.astype(jnp.bfloat16), plan["Kp"], plan["Np"]),
                 bias_packed=_pad2(b.reshape(1, cout).astype(jnp.float32),
                                   1, plan["Np"]))
    return layer, tuple(out_sp)


def _apply_layer(L, x):
    N, D, H, W, C = x.shape
    if L["kind"] == "conv":
        p = L["pad"]
        xp = jnp.pad(x, ((0, 0), (p, p), (p, p), (p, p), (0, 0)))
        cols, (n, Do, Ho, Wo) = _im2col3d(xp, L["k"], L["stride"], L["taps"])
    else:
        s = L["stride"]
        xd = jnp.zeros((N, (D - 1) * s + 1, (H - 1) * s + 1, (W - 1) * s + 1, C),
                       x.dtype)
        xd = xd.at[:, ::s, ::s, ::s, :].set(x)
        lo, hi = L["lo"], L["hi"]
        xp = jnp.pad(xd, ((0, 0), (lo, hi), (lo, hi), (lo, hi), (0, 0)))
        cols, (n, Do, Ho, Wo) = _im2col3d(xp, L["k"], 1, L["taps"])

    fuse_act = L["act"] if L["bn"] is None else None
    y, ch_sum, ch_sq = matmul_fused(cols, L["b_packed"], L["bias_packed"],
                                    L["plan"], act=fuse_act)

    if L["bn"] is not None:
        gamma, beta = L["bn"]
        m = float(y.shape[0])
        mean = ch_sum / m
        # One-pass E[x^2]-E[x]^2 in f32 (biased var, training-mode BN); the clamp
        # guards round-off.  Matches PyTorch BN up to f32 rounding.
        var = jnp.maximum(ch_sq / m - mean * mean, 0.0)
        scale = gamma * jax.lax.rsqrt(var + 1e-5)
        shift = beta - mean * scale
        y = affine_act(y, scale, shift, L["act"])

    return y.reshape(n, Do, Ho, Wo, L["cout"])


# ------------------------------ parameters -----------------------------------


def _init_conv(key, cout, cin, k):
    kw, kb = jax.random.split(key)
    fan_in = cin * k * k * k
    w = jax.random.normal(kw, (cout, cin, k, k, k), jnp.float32) / jnp.sqrt(fan_in)
    b = 0.01 * jax.random.normal(kb, (cout,), jnp.float32)
    return w, b


def _init_convT(key, cin, cout, k):
    kw, kb = jax.random.split(key)
    fan_in = cin * k * k * k
    w = jax.random.normal(kw, (cin, cout, k, k, k), jnp.float32) / jnp.sqrt(fan_in)
    b = 0.01 * jax.random.normal(kb, (cout,), jnp.float32)
    return w, b


def _init_bn(key, c):
    kg, kb = jax.random.split(key)
    gamma = 1.0 + 0.1 * jax.random.normal(kg, (c,), jnp.float32)
    beta = 0.1 * jax.random.normal(kb, (c,), jnp.float32)
    return gamma, beta


def init_generator_params(key):
    ks = jax.random.split(key, 18)
    p = {}
    p["down1"] = (*_init_conv(ks[0], 64, 1, 3), *_init_bn(ks[1], 64))
    p["down2"] = (*_init_conv(ks[2], 64, 64, 3), *_init_bn(ks[3], 64))
    p["down3"] = (*_init_conv(ks[4], 128, 64, 3), *_init_bn(ks[5], 128))
    p["down4"] = (*_init_conv(ks[6], 256, 128, 3), *_init_bn(ks[7], 256))
    p["bottle"] = _init_conv(ks[8], 5000, 256, 1)
    p["up1"] = (*_init_convT(ks[9], 5000, 256, 3), *_init_bn(ks[10], 256))
    p["up2"] = (*_init_convT(ks[11], 256, 128, 3), *_init_bn(ks[12], 128))
    p["up3"] = (*_init_convT(ks[13], 128, 64, 3), *_init_bn(ks[14], 64))
    p["up4"] = (*_init_convT(ks[15], 64, 64, 3), *_init_bn(ks[16], 64))
    p["out"] = _init_conv(ks[17], 1, 64, 2)
    return p


def prepare_generator(params, batch, spatial):
    """Pack every layer's weight matrix (bf16, matmul layout, tap-pruned,
    tile-padded) once for a fixed input shape [batch, 1, *spatial]."""
    layers = []
    sp = tuple(spatial)
    for name in ("down1", "down2", "down3", "down4"):
        w, b, g, bt = params[name]
        L, sp = _prep_conv(w, b, (g, bt), "relu", 2, 1, sp, batch)
        layers.append(L)
    wb, bb = params["bottle"]
    L, sp = _prep_conv(wb, bb, None, None, 1, 0, sp, batch)   # 1x1x1, bias, no act
    layers.append(L)
    for name, op in (("up1", 0), ("up2", 1), ("up3", 1), ("up4", 1)):
        w, b, g, bt = params[name]
        L, sp = _prep_convT(w, b, (g, bt), "leaky_relu", 2, 1, op, sp, batch)
        layers.append(L)
    wo, bo = params["out"]
    L, sp = _prep_conv(wo, bo, None, "sigmoid", 1, 0, sp, batch)  # sigmoid fused
    layers.append(L)
    return layers, sp


# -------------------------------- forward ------------------------------------


def generator_forward(layers, inp_ncdhw):
    """inp_ncdhw: [N, 1, D, H, W] (PyTorch layout). Returns [N, 1, D', H', W']."""
    x = jnp.transpose(inp_ncdhw, (0, 2, 3, 4, 1)).astype(jnp.float32)
    for L in layers:
        x = _apply_layer(L, x)
    return jnp.transpose(x, (0, 4, 1, 2, 3))  # back to NCDHW


if __name__ == "__main__":
    key = jax.random.PRNGKey(0)
    pkey, xkey = jax.random.split(key)
    params = init_generator_params(pkey)

    # PyTorch-style NCDHW input: batch=2, 1 channel, 16^3 volume (smallest volume
    # that survives four stride-2 downsamplings of this architecture).
    batch, spatial = 2, (16, 16, 16)
    layers, _ = prepare_generator(params, batch, spatial)

    inp = jax.random.normal(xkey, (batch, 1) + spatial, jnp.float32)
    out = generator_forward(layers, inp)
    out = jax.block_until_ready(out)

    assert out.shape == (2, 1, 7, 7, 7), out.shape
    assert bool(jnp.all(jnp.isfinite(out)))
    assert bool(jnp.all(out >= 0.0)) and bool(jnp.all(out <= 1.0))  # sigmoid range
    print("KERNEL_OK")
</pallas_src>

<mosaic_0001>
module attributes {stable_mosaic.version = 11 : i64} {
  func.func @_mm_kernel(%arg0: i32, %arg1: i32, %arg2: i32, %arg3: memref<128x128xbf16, #tpu.memory_space<vmem>>, %arg4: memref<128x128xbf16, #tpu.memory_space<vmem>>, %arg5: memref<1x128xf32, #tpu.memory_space<vmem>>, %arg6: memref<128x128xf32, #tpu.memory_space<vmem>>, %arg7: memref<8x128xf32, #tpu.memory_space<vmem>>, %arg8: memref<8x128xf32, #tpu.memory_space<vmem>>, %arg9: memref<128x128xf32, #tpu.memory_space<vmem>>) attributes {dimension_semantics = [#tpu.dimension_semantics<parallel>, #tpu.dimension_semantics<parallel>, #tpu.dimension_semantics<arbitrary>], iteration_bounds = array<i64: 8, 1, 1>, scalar_prefetch = 0 : i64, scratch_operands = 1 : i64, tpu.core_type = #tpu.core_type<tc>, window_params = [{transform_indices = @transform_0, window_bounds = array<i64: 128, 128>}, {transform_indices = @transform_1, window_bounds = array<i64: 128, 128>}, {transform_indices = @transform_2, window_bounds = array<i64: 1, 128>}, {transform_indices = @transform_3, window_bounds = array<i64: 128, 128>}, {transform_indices = @transform_4, window_bounds = array<i64: 8, 128>}, {transform_indices = @transform_5, window_bounds = array<i64: 8, 128>}]} {
    %c0_i32 = arith.constant 0 : i32
    %0 = arith.cmpi eq, %arg2, %c0_i32 : i32
    %1 = arith.extui %0 : i1 to i32
    %c0_i32_0 = arith.constant 0 : i32
    %2 = arith.cmpi ne, %1, %c0_i32_0 : i32
    scf.if %2 {
      %cst_10 = arith.constant 0.000000e+00 : f32
      %12 = vector.broadcast %cst_10 : f32 to vector<128x128xf32>
      %c0_11 = arith.constant 0 : index
      %c0_12 = arith.constant 0 : index
      %13 = vector.load %arg9[%c0_11, %c0_12] : memref<128x128xf32, #tpu.memory_space<vmem>>, vector<128x128xf32>
      tpu.vector_store %arg9[%c0_11, %c0_12], %12 {strides = array<i32>} : memref<128x128xf32, #tpu.memory_space<vmem>>, vector<128x128xf32>,
    } else {
    }
    %c0 = arith.constant 0 : index
    %c0_1 = arith.constant 0 : index
    %3 = vector.load %arg9[%c0, %c0_1] : memref<128x128xf32, #tpu.memory_space<vmem>>, vector<128x128xf32>
    %c0_2 = arith.constant 0 : index
    %c0_3 = arith.constant 0 : index
    %4 = vector.load %arg3[%c0_2, %c0_3] : memref<128x128xbf16, #tpu.memory_space<vmem>>, vector<128x128xbf16>
    %c0_4 = arith.constant 0 : index
    %c0_5 = arith.constant 0 : index
    %5 = vector.load %arg4[%c0_4, %c0_5] : memref<128x128xbf16, #tpu.memory_space<vmem>>, vector<128x128xbf16>
    %cst = arith.constant dense<0.000000e+00> : vector<128x128xf32>
    %6 = tpu.matmul %4, %5, %cst {dimension_numbers = #tpu.dot_dimension_numbers<[1], [0], [0], [1], [0, 0, 1, 1], [], []>} : vector<128x128xbf16>, vector<128x128xbf16>, vector<128x128xf32> -> vector<128x128xf32>
    %7 = arith.addf %3, %6 : vector<128x128xf32>
    %c0_6 = arith.constant 0 : index
    %c0_7 = arith.constant 0 : index
    %8 = vector.load %arg9[%c0_6, %c0_7] : memref<128x128xf32, #tpu.memory_space<vmem>>, vector<128x128xf32>
    tpu.vector_store %arg9[%c0_6, %c0_7], %7 {strides = array<i32>} : memref<128x128xf32, #tpu.memory_space<vmem>>, vector<128x128xf32>,
    %c0_i32_8 = arith.constant 0 : i32
    %9 = arith.cmpi eq, %arg2, %c0_i32_8 : i32
    %10 = arith.extui %9 : i1 to i32
    %c0_i32_9 = arith.constant 0 : i32
    %11 = arith.cmpi ne, %10, %c0_i32_9 : i32
    scf.if %11 {
      %c0_10 = arith.constant 0 : index
      %c0_11 = arith.constant 0 : index
      %12 = vector.load %arg9[%c0_10, %c0_11] : memref<128x128xf32, #tpu.memory_space<vmem>>, vector<128x128xf32>
      %c0_12 = arith.constant 0 : index
      %c0_13 = arith.constant 0 : index
      %13 = vector.load %arg5[%c0_12, %c0_13] : memref<1x128xf32, #tpu.memory_space<vmem>>, vector<1x128xf32>
      %14 = vector.broadcast %13 : vector<1x128xf32> to vector<128x128xf32>
      %15 = arith.addf %12, %14 : vector<128x128xf32>
      %cst_14 = arith.constant dense<0.000000e+00> : vector<128xf32>
      %16 = vector.multi_reduction <add>, %15, %cst_14 [0] : vector<128x128xf32> to vector<128xf32>
      %17 = vector.shape_cast %16 : vector<128xf32> to vector<1x128xf32>
      %18 = vector.shape_cast %17 : vector<1x128xf32> to vector<1x128xf32>
      %19 = vector.broadcast %18 : vector<1x128xf32> to vector<8x128xf32>
      %c0_15 = arith.constant 0 : index
      %c0_16 = arith.constant 0 : index
      %20 = vector.load %arg7[%c0_15, %c0_16] : memref<8x128xf32, #tpu.memory_space<vmem>>, vector<8x128xf32>
      tpu.vector_store %arg7[%c0_15, %c0_16], %19 {strides = array<i32>} : memref<8x128xf32, #tpu.memory_space<vmem>>, vector<8x128xf32>,
      %21 = arith.mulf %15, %15 : vector<128x128xf32>
      %cst_17 = arith.constant dense<0.000000e+00> : vector<128xf32>
      %22 = vector.multi_reduction <add>, %21, %cst_17 [0] : vector<128x128xf32> to vector<128xf32>
      %23 = vector.shape_cast %22 : vector<128xf32> to vector<1x128xf32>
      %24 = vector.shape_cast %23 : vector<1x128xf32> to vector<1x128xf32>
      %25 = vector.broadcast %24 : vector<1x128xf32> to vector<8x128xf32>
      %c0_18 = arith.constant 0 : index
      %c0_19 = arith.constant 0 : index
      %26 = vector.load %arg8[%c0_18, %c0_19] : memref<8x128xf32, #tpu.memory_space<vmem>>, vector<8x128xf32>
      tpu.vector_store %arg8[%c0_18, %c0_19], %25 {strides = array<i32>} : memref<8x128xf32, #tpu.memory_space<vmem>>, vector<8x128xf32>,
      %c0_20 = arith.constant 0 : index
      %c0_21 = arith.constant 0 : index
      %27 = vector.load %arg6[%c0_20, %c0_21] : memref<128x128xf32, #tpu.memory_space<vmem>>, vector<128x128xf32>
      tpu.vector_store %arg6[%c0_20, %c0_21], %15 {strides = array<i32>} : memref<128x128xf32, #tpu.memory_space<vmem>>, vector<128x128xf32>,
    } else {
    }
    return
  }
  func.func @transform_0(%arg0: i32, %arg1: i32, %arg2: i32) -> (i32, i32) {
    %c0_i32 = arith.constant 0 : i32
    return %arg0, %arg2 : i32, i32
  }
  func.func @transform_1(%arg0: i32, %arg1: i32, %arg2: i32) -> (i32, i32) {
    %c0_i32 = arith.constant 0 : i32
    return %arg2, %arg1 : i32, i32
  }
  func.func @transform_2(%arg0: i32, %arg1: i32, %arg2: i32) -> (i32, i32) {
    %c0_i32 = arith.constant 0 : i32
    %c0_i32_0 = arith.constant 0 : i32
    return %c0_i32, %arg1 : i32, i32
  }
  func.func @transform_3(%arg0: i32, %arg1: i32, %arg2: i32) -> (i32, i32) {
    %c0_i32 = arith.constant 0 : i32
    return %arg0, %arg1 : i32, i32
  }
  func.func @transform_4(%arg0: i32, %arg1: i32, %arg2: i32) -> (i32, i32) {
    %c0_i32 = arith.constant 0 : i32
    return %arg0, %arg1 : i32, i32
  }
  func.func @transform_5(%arg0: i32, %arg1: i32, %arg2: i32) -> (i32, i32) {
    %c0_i32 = arith.constant 0 : i32
    return %arg0, %arg1 : i32, i32
  }
}

</mosaic_0001>

<llo_original>
// kernel: tpu_custom_call.1
$region0: #{tpu_custom_call.1}
  #allocation0 [shape = 'u32[]', space=smem, size = 0x4, offset = 0x4, fixed_abs, tag = 'smem constant byte address 0x4 - core index']
  #allocation1 [shape = 'u32[144,128]{1,0:T(1,128)}', space=vmem, size = 0x12000, scoped, tag = 'internal scratch']
  #allocation2 [shape = 'f32[128,128]{1,0:T(8,128)}', space=vmem, size = 0x10000, scoped, tag = 'scratch operand']
  %s0 = inlined_call_operand.hbm [shape: bf16[1024,128], index: 0, kind: input, shape index: {}]
  %s1 = inlined_call_operand.hbm [shape: bf16[128,128], index: 1, kind: input, shape index: {}]
  %s2 = inlined_call_operand.vmem [shape: f32[1,128], index: 2, kind: input, shape index: {}]
  %s3 = inlined_call_operand.hbm [shape: f32[1024,128], index: 3, kind: output, shape index: {0}]
  %s4 = inlined_call_operand.hbm [shape: f32[64,128], index: 4, kind: output, shape index: {1}]
  %s5 = inlined_call_operand.hbm [shape: f32[64,128], index: 5, kind: output, shape index: {2}]
  %6 = xla_tuple %s3, %s4, %s5
  %s7 = sld [smem:[#allocation0]]
  $region77: #{tpu_custom_call.1} parent=0
    _
  %s9 = ssub.s32 1, %s7
  %s10 = scalar_select 0, %s9, %s7
  $region1: #{tpu_custom_call.1} parent=0
    #allocation3 [shape = 'u8[65536]{0}', space=vmem, size = 0x10000, scoped, tag = 'input window, operand 0']
    #allocation4 [shape = 's32[2]{0}', space=sflag, size = 0x8, scoped, tag = 'scoped memory for tpu_custom_call.1']
    #allocation5 [shape = 's32[2]{0}', space=sflag, size = 0x8, scoped, tag = 'scoped memory for tpu_custom_call.1']
    #allocation6 [shape = 'u8[32768]{0}', space=vmem, size = 0x8000, scoped, tag = 'input window, operand 1, single buffered']
    #allocation7 [shape = 's32[1]{0}', space=sflag, size = 0x4, scoped, tag = 'scoped memory for tpu_custom_call.1']
    #allocation8 [shape = 'u8[131072]{0}', space=vmem, size = 0x20000, scoped, tag = 'output window, operand 0']
    #allocation9 [shape = 'u8[8192]{0}', space=vmem, size = 0x2000, scoped, tag = 'output window, operand 1']
    #allocation10 [shape = 's32[2]{0}', space=sflag, size = 0x8, scoped, tag = 'scoped memory for tpu_custom_call.1']
    #allocation11 [shape = 'u8[8192]{0}', space=vmem, size = 0x2000, scoped, tag = 'output window, operand 2']
    %11 = vsyncpa [#allocation4], 0
    %s12 = scalar_lea.sflag [#allocation4], 1
    %13 = vsyncpa %s12, 0
    %14 = vsyncpa [#allocation7], 0
    %15 = vsyncpa [#allocation5], 0
    %s16 = scalar_lea.sflag [#allocation5], 1
    %17 = vsyncpa %s16, 0
    %18 = vsyncpa [#allocation10], 0
    %s19 = scalar_lea.sflag [#allocation10], 1
    %20 = vsyncpa %s19, 0
    loop: start=0, step=1, limit=10
    $region2: #{tpu_custom_call.1} parent=1 // loop_pre_header
      _
    $region3: #{tpu_custom_call.1} parent=1 // loop_header
      %s22 = sphi 0, %s26
      %p23 = scmp.ge.s32.totalorder %s22, 10
      %s29 = sphi 0, %s48
      %s30 = sphi 0, %s44
      %s31 = sphi 0, %s40
      %s32 = sphi 0, %s29
      %s33 = sphi 0, %s30
      %s34 = sphi 0, %s31
      %s35 = sphi 0, %s32
      %s36 = sphi 0, %s33
      %s37 = sphi 0, %s34
      %s53 = sphi 0, %s55
      %s56 = sphi 0, %s53
      %s57 = sphi 0, %s56
      %s73 = sphi 0, %s57
      %s81 = sphi 0, %s83
      %s84 = sphi 0, %s81
      %s85 = sphi 0, %s84
      %s101 = sphi 0, %s85
      %s107 = sphi 0, %s109
      %s110 = sphi 0, %s107
      %s111 = sphi 0, %s110
      %s127 = sphi 0, %s111
      %s135 = sphi 0, %s137
      %s138 = sphi 0, %s135
      %s139 = sphi 0, %s138
      %s155 = sphi 0, %s139
      %s163 = sphi 0, %s165
      %s166 = sphi 0, %s163
      %s167 = sphi 0, %s166
      %s183 = sphi 0, %s167
      %s191 = sphi 0, %s193
      %s194 = sphi 0, %s191
      %s195 = sphi 0, %s194
      %s211 = sphi 0, %s195
    $region4: #{tpu_custom_call.1} parent=1 // loop_header_branch
      %25 = sbr.rel (%p23) target = $region8
    $region5: #{tpu_custom_call.1} parent=1 // loop_body
      %s27 = ssub.s32 %s22, 1
      %s28 = ssub.s32 %s22, 2
      %s38 = sadd.s32 1, %s31
      %p39 = scmp.ge.s32.totalorder %s38, 1
      %s40 = scalar_select %p39, 0, %s38
      %s41 = sadd.s32 1, %s30
      %s42 = scalar_select %p39, %s41, %s30
      %p43 = scmp.ge.s32.totalorder %s42, 1
      %s44 = scalar_select %p43, 0, %s42
      %s45 = sadd.s32 1, %s29
      %s46 = scalar_select %p43, %s45, %s29
      %p47 = scmp.ge.s32.totalorder %s46, 8
      %s48 = scalar_select %p47, 0, %s46
      %s49 = ssub.s32 %s29, %s48
      %s50 = ssub.s32 %s31, %s40
      %s51 = sor.u32 %s49, %s50
      %p52 = scmp.eq.s32.totalorder %s51, 0
      %s54 = sadd.s32 %s53, 1
      %s55 = scalar_select %p52, %s53, %s54
      %p58 = pneg %p52
      %p59 = scmp.eq.s32.totalorder %s22, 7
      %p60 = por %p58, %p59
      %p61 = scmp.ne.s32.totalorder %s53, %s56
      %p62 = scmp.eq.s32.totalorder %s22, 0
      %p63 = por %p61, %p62
      %p64 = scmp.ne.s32.totalorder %s53, %s56
      %p65 = scmp.eq.s32.totalorder %s27, 7
      %p66 = por %p64, %p65
      %p67 = scmp.ne.s32.totalorder %s56, %s57
      %p68 = scmp.eq.s32.totalorder %s27, 0
      %p69 = por %p67, %p68
      %p70 = scmp.ne.s32.totalorder %s56, %s57
      %p71 = scmp.eq.s32.totalorder %s28, 7
      %p72 = por %p70, %p71
      %p74 = scmp.ne.s32.totalorder %s57, %s73
      %p75 = scmp.eq.s32.totalorder %s28, 0
      %p76 = por %p74, %p75
      %s77 = ssub.s32 %s31, %s40
      %s78 = ssub.s32 %s30, %s44
      %s79 = sor.u32 %s77, %s78
      %p80 = scmp.eq.s32.totalorder %s79, 0
      %s82 = sadd.s32 %s81, 1
      %s83 = scalar_select %p80, %s81, %s82
      %p86 = pneg %p80
      %p87 = scmp.eq.s32.totalorder %s22, 7
      %p88 = por %p86, %p87
      %p89 = scmp.ne.s32.totalorder %s81, %s84
      %p90 = scmp.eq.s32.totalorder %s22, 0
      %p91 = por %p89, %p90
      %p92 = scmp.ne.s32.totalorder %s81, %s84
      %p93 = scmp.eq.s32.totalorder %s27, 7
      %p94 = por %p92, %p93
      %p95 = scmp.ne.s32.totalorder %s84, %s85
      %p96 = scmp.eq.s32.totalorder %s27, 0
      %p97 = por %p95, %p96
      %p98 = scmp.ne.s32.totalorder %s84, %s85
      %p99 = scmp.eq.s32.totalorder %s28, 7
      %p100 = por %p98, %p99
      %p102 = scmp.ne.s32.totalorder %s85, %s101
      %p103 = scmp.eq.s32.totalorder %s28, 0
      %p104 = por %p102, %p103
      %s105 = ssub.s32 %s30, %s44
      %p106 = scmp.eq.s32.totalorder %s105, 0
      %s108 = sadd.s32 %s107, 1
      %s109 = scalar_select %p106, %s107, %s108
      %p112 = pneg %p106
      %p113 = scmp.eq.s32.totalorder %s22, 7
      %p114 = por %p112, %p113
      %p115 = scmp.ne.s32.totalorder %s107, %s110
      %p116 = scmp.eq.s32.totalorder %s22, 0
      %p117 = por %p115, %p116
      %p118 = scmp.ne.s32.totalorder %s107, %s110
      %p119 = scmp.eq.s32.totalorder %s27, 7
      %p120 = por %p118, %p119
      %p121 = scmp.ne.s32.totalorder %s110, %s111
      %p122 = scmp.eq.s32.totalorder %s27, 0
      %p123 = por %p121, %p122
      %p124 = scmp.ne.s32.totalorder %s110, %s111
      %p125 = scmp.eq.s32.totalorder %s28, 7
      %p126 = por %p124, %p125
      %p128 = scmp.ne.s32.totalorder %s111, %s127
      %p129 = scmp.eq.s32.totalorder %s28, 0
      %p130 = por %p128, %p129
      %s131 = ssub.s32 %s29, %s48
      %s132 = ssub.s32 %s30, %s44
      %s133 = sor.u32 %s131, %s132
      %p134 = scmp.eq.s32.totalorder %s133, 0
      %s136 = sadd.s32 %s135, 1
      %s137 = scalar_select %p134, %s135, %s136
      %p140 = pneg %p134
      %p141 = scmp.eq.s32.totalorder %s22, 7
      %p142 = por %p140, %p141
      %p143 = scmp.ne.s32.totalorder %s135, %s138
      %p144 = scmp.eq.s32.totalorder %s22, 0
      %p145 = por %p143, %p144
      %p146 = scmp.ne.s32.totalorder %s135, %s138
      %p147 = scmp.eq.s32.totalorder %s27, 7
      %p148 = por %p146, %p147
      %p149 = scmp.ne.s32.totalorder %s138, %s139
      %p150 = scmp.eq.s32.totalorder %s27, 0
      %p151 = por %p149, %p150
      %p152 = scmp.ne.s32.totalorder %s138, %s139
      %p153 = scmp.eq.s32.totalorder %s28, 7
      %p154 = por %p152, %p153
      %p156 = scmp.ne.s32.totalorder %s139, %s155
      %p157 = scmp.eq.s32.totalorder %s28, 0
      %p158 = por %p156, %p157
      %s159 = ssub.s32 %s29, %s48
      %s160 = ssub.s32 %s30, %s44
      %s161 = sor.u32 %s159, %s160
      %p162 = scmp.eq.s32.totalorder %s161, 0
      %s164 = sadd.s32 %s163, 1
      %s165 = scalar_select %p162, %s163, %s164
      %p168 = pneg %p162
      %p169 = scmp.eq.s32.totalorder %s22, 7
      %p170 = por %p168, %p169
      %p171 = scmp.ne.s32.totalorder %s163, %s166
      %p172 = scmp.eq.s32.totalorder %s22, 0
      %p173 = por %p171, %p172
      %p174 = scmp.ne.s32.totalorder %s163, %s166
      %p175 = scmp.eq.s32.totalorder %s27, 7
      %p176 = por %p174, %p175
      %p177 = scmp.ne.s32.totalorder %s166, %s167
      %p178 = scmp.eq.s32.totalorder %s27, 0
      %p179 = por %p177, %p178
      %p180 = scmp.ne.s32.totalorder %s166, %s167
      %p181 = scmp.eq.s32.totalorder %s28, 7
      %p182 = por %p180, %p181
      %p184 = scmp.ne.s32.totalorder %s167, %s183
      %p185 = scmp.eq.s32.totalorder %s28, 0
      %p186 = por %p184, %p185
      %s187 = ssub.s32 %s29, %s48
      %s188 = ssub.s32 %s30, %s44
      %s189 = sor.u32 %s187, %s188
      %p190 = scmp.eq.s32.totalorder %s189, 0
      %s192 = sadd.s32 %s191, 1
      %s193 = scalar_select %p190, %s191, %s192
      %p196 = pneg %p190
      %p197 = scmp.eq.s32.totalorder %s22, 7
      %p198 = por %p196, %p197
      %p199 = scmp.ne.s32.totalorder %s191, %s194
      %p200 = scmp.eq.s32.totalorder %s22, 0
      %p201 = por %p199, %p200
      %p202 = scmp.ne.s32.totalorder %s191, %s194
      %p203 = scmp.eq.s32.totalorder %s27, 7
      %p204 = por %p202, %p203
      %p205 = scmp.ne.s32.totalorder %s194, %s195
      %p206 = scmp.eq.s32.totalorder %s27, 0
      %p207 = por %p205, %p206
      %p208 = scmp.ne.s32.totalorder %s194, %s195
      %p209 = scmp.eq.s32.totalorder %s28, 7
      %p210 = por %p208, %p209
      %p212 = scmp.ne.s32.totalorder %s195, %s211
      %p213 = scmp.eq.s32.totalorder %s28, 0
      %p214 = por %p212, %p213
      %p215 = scmp.le.s32.totalorder 1, %s22
      %p216 = scmp.lt.s32.totalorder %s22, 9
      %p217 = pnand %p215, %p216
      %p218 = pneg %p217
      // Predicated region
      $region9: #{tpu_custom_call.1} parent=5 // pred_check
        _
      $region10: #{tpu_custom_call.1} parent=5 // pred_check_branch
        %220 = sbr.rel (%p217) target = $region12
      $region11: #{tpu_custom_call.1} parent=5 // pred_region
        %s221 = ssub.s32 %s22, 1
        // Predicated region
        $region13: #{tpu_custom_call.1} parent=11 // pred_check
          %p222 = pneg %p97
        $region14: #{tpu_custom_call.1} parent=11 // pred_check_branch
          %224 = sbr.rel (%p222) target = $region16
        $region15: #{tpu_custom_call.1} parent=11 // pred_region
          %s225 = smul.u32 16, %s34
          %s227 = ssub.s32 1024, 1024
          %228 = vsyncadd [#allocation7], %s227
          %s229 = sadd.s32 %s33, %s225
          %s230 = smul.addr %s229, 64
          %s231 = scalar_lea.hbm %s1, %s230
          %s232 = sshll.u32 [#allocation6], 4
          %s233 = int_to_ptr.vmem [resolvable:$true] %s232
          %238 = dma.hbm_to_vmem [thread:$0]  %s231, 1024, %s233, [#allocation7], 64, 64, 4
        $region16: #{tpu_custom_call.1} parent=11 // pred_fallthru
          _
        // Predicated region
        $region17: #{tpu_custom_call.1} parent=11 // pred_check
          %p239 = pneg %p123
        $region18: #{tpu_custom_call.1} parent=11 // pred_check_branch
          %241 = sbr.rel (%p239) target = $region20
        $region19: #{tpu_custom_call.1} parent=11 // pred_region
          %p242 = scmp.lt.s32.totalorder %s33, 0
          %s243 = scalar_select %p242, %s33, 0
          %s244 = scalar_lea.vmem %s2, %s243
        $region20: #{tpu_custom_call.1} parent=11 // pred_fallthru
          _
      $region12: #{tpu_custom_call.1} parent=5 // pred_fallthru
        _
      %p245 = scmp.lt.s32.totalorder %s22, 8
      // Predicated region
      $region21: #{tpu_custom_call.1} parent=5 // pred_check
        %p246 = pneg %p245
      $region22: #{tpu_custom_call.1} parent=5 // pred_check_branch
        %248 = sbr.rel (%p246) target = $region24
      $region23: #{tpu_custom_call.1} parent=5 // pred_region
        // Predicated region
        $region25: #{tpu_custom_call.1} parent=23 // pred_check
          %p249 = pneg %p63
        $region26: #{tpu_custom_call.1} parent=23 // pred_check_branch
          %251 = sbr.rel (%p249) target = $region28
        $region27: #{tpu_custom_call.1} parent=23 // pred_region
          %s252 = sand.u32 %s53, 1
          %s253 = scalar_lea.sflag [#allocation4], %s252
          %s254 = sand.u32 %s53, 1
          %s255 = smul.addr %s254, 64
          %s256 = scalar_lea.vmem [#allocation3], %s255
          %s257 = smul.u32 16, %s29
          %s259 = ssub.s32 1024, 1024
          %260 = vsyncadd %s253, %s259
          %s261 = sadd.s32 %s31, %s257
          %s262 = smul.addr %s261, 64
          %s263 = scalar_lea.hbm %s0, %s262
          %s264 = sshll.u32 %s256, 4
          %s265 = int_to_ptr.vmem [resolvable:$true] %s264
          %270 = dma.hbm_to_vmem [thread:$0]  %s263, 1024, %s265, %s253, 64, 64, 4
        $region28: #{tpu_custom_call.1} parent=23 // pred_fallthru
          _
      $region24: #{tpu_custom_call.1} parent=5 // pred_fallthru
        _
      %p271 = scmp.le.s32.totalorder 1, %s22
      %p272 = scmp.lt.s32.totalorder %s22, 9
      %p273 = pnand %p271, %p272
      %p274 = pneg %p273
      // Predicated region
      $region29: #{tpu_custom_call.1} parent=5 // pred_check
        _
      $region30: #{tpu_custom_call.1} parent=5 // pred_check_branch
        %276 = sbr.rel (%p273) target = $region32
      $region31: #{tpu_custom_call.1} parent=5 // pred_region
        %s277 = ssub.s32 %s22, 1
        %s278 = sand.u32 %s56, 1
        %s279 = scalar_lea.sflag [#allocation4], %s278
        %s280 = sand.u32 %s56, 1
        %s281 = smul.addr %s280, 64
        %s282 = scalar_lea.vmem [#allocation3], %s281
        // Predicated region
        $region33: #{tpu_custom_call.1} parent=31 // pred_check
          %p283 = pneg %p69
        $region34: #{tpu_custom_call.1} parent=31 // pred_check_branch
          %285 = sbr.rel (%p283) target = $region36
        $region35: #{tpu_custom_call.1} parent=31 // pred_region
          %286 = dma.done %s279, 1024
        $region36: #{tpu_custom_call.1} parent=31 // pred_fallthru
          _
        // Predicated region
        $region37: #{tpu_custom_call.1} parent=31 // pred_check
          %p287 = pneg %p97
        $region38: #{tpu_custom_call.1} parent=31 // pred_check_branch
          %289 = sbr.rel (%p287) target = $region40
        $region39: #{tpu_custom_call.1} parent=31 // pred_region
          %290 = dma.done [#allocation7], 1024
        $region40: #{tpu_custom_call.1} parent=31 // pred_fallthru
          _
        %s291 = sand.u32 %s56, 1
        %s292 = scalar_lea.sflag [#allocation4], %s291
        %s293 = sand.u32 %s56, 1
        %s294 = smul.addr %s293, 64
        %s295 = scalar_lea.vmem [#allocation3], %s294
        %p296 = pneg %p69
        %p297 = pneg %p66
        %p298 = pneg %p97
        %p299 = pneg %p94
        %p300 = scmp.lt.s32.totalorder %s33, 0
        %s301 = scalar_select %p300, %s33, 0
        %s302 = scalar_lea.vmem %s2, %s301
        %p303 = pneg %p123
        %p304 = pneg %p120
        %p305 = pneg %p151
        %p306 = pneg %p148
        %s307 = sand.u32 %s138, 1
        %s308 = scalar_lea.sflag [#allocation5], %s307
        %s309 = sand.u32 %s138, 1
        %s310 = smul.addr %s309, 128
        %s311 = scalar_lea.vmem [#allocation8], %s310
        %p312 = pneg %p179
        %p313 = pneg %p176
        %s314 = sand.u32 %s27, 1
        %s315 = scalar_lea.sflag [#allocation10], %s314
        %s316 = sand.u32 %s166, 1
        %s317 = smul.addr %s316, 8
        %s318 = scalar_lea.vmem [#allocation9], %s317
        %p319 = pneg %p207
        %p320 = pneg %p204
        %s321 = sand.u32 %s27, 1
        %s322 = scalar_lea.sflag [#allocation10], %s321
        %s323 = sand.u32 %s194, 1
        %s324 = smul.addr %s323, 8
        %s325 = scalar_lea.vmem [#allocation11], %s324
        %s326 = smul.u32 16, %s32
        %s327 = smul.u32 16, %s34
        %p328 = scmp.lt.s32.totalorder %s33, 0
        %s329 = scalar_select %p328, %s33, 0
        %s330 = scalar_lea.vmem %s2, %s329
        %s331 = smul.u32 16, %s32
        %p333 = scmp.eq.s32.totalorder %s34, 0
        // Predicated region
        $region41: #{tpu_custom_call.1} parent=31 // pred_check
          %p334 = pneg %p333
        $region42: #{tpu_custom_call.1} parent=31 // pred_check_branch
          %336 = sbr.rel (%p334) target = $region44
        $region43: #{tpu_custom_call.1} parent=31 // pred_region
          %337 = vst [vmem:[#allocation2] sm:$0xff] 0.0
          %338 = vst [vmem:[#allocation2 + $0x8] sm:$0xff] 0.0
          %339 = vst [vmem:[#allocation2 + $0x10] sm:$0xff] 0.0
          %340 = vst [vmem:[#allocation2 + $0x18] sm:$0xff] 0.0
          %341 = vst [vmem:[#allocation2 + $0x20] sm:$0xff] 0.0
          %342 = vst [vmem:[#allocation2 + $0x28] sm:$0xff] 0.0
          %343 = vst [vmem:[#allocation2 + $0x30] sm:$0xff] 0.0
          %344 = vst [vmem:[#allocation2 + $0x38] sm:$0xff] 0.0
          %345 = vst [vmem:[#allocation2 + $0x40] sm:$0xff] 0.0
          %346 = vst [vmem:[#allocation2 + $0x48] sm:$0xff] 0.0
          %347 = vst [vmem:[#allocation2 + $0x50] sm:$0xff] 0.0
          %348 = vst [vmem:[#allocation2 + $0x58] sm:$0xff] 0.0
          %349 = vst [vmem:[#allocation2 + $0x60] sm:$0xff] 0.0
          %350 = vst [vmem:[#allocation2 + $0x68] sm:$0xff] 0.0
          %351 = vst [vmem:[#allocation2 + $0x70] sm:$0xff] 0.0
          %352 = vst [vmem:[#allocation2 + $0x78] sm:$0xff] 0.0
        $region44: #{tpu_custom_call.1} parent=31 // pred_fallthru
          _
        %v353 = vld [vmem:[#allocation2] sm:$0xff]
        %v354 = vld [vmem:[#allocation2 + $0x8] sm:$0xff]
        %v355 = vld [vmem:[#allocation2 + $0x10] sm:$0xff]
        %v356 = vld [vmem:[#allocation2 + $0x18] sm:$0xff]
        %v357 = vld [vmem:[#allocation2 + $0x20] sm:$0xff]
        %v358 = vld [vmem:[#allocation2 + $0x28] sm:$0xff]
        %v359 = vld [vmem:[#allocation2 + $0x30] sm:$0xff]
        %v360 = vld [vmem:[#allocation2 + $0x38] sm:$0xff]
        %v361 = vld [vmem:[#allocation2 + $0x40] sm:$0xff]
        %v362 = vld [vmem:[#allocation2 + $0x48] sm:$0xff]
        %v363 = vld [vmem:[#allocation2 + $0x50] sm:$0xff]
        %v364 = vld [vmem:[#allocation2 + $0x58] sm:$0xff]
        %v365 = vld [vmem:[#allocation2 + $0x60] sm:$0xff]
        %v366 = vld [vmem:[#allocation2 + $0x68] sm:$0xff]
        %v367 = vld [vmem:[#allocation2 + $0x70] sm:$0xff]
        %v368 = vld [vmem:[#allocation2 + $0x78] sm:$0xff]
        %v369 = vld [vmem:[%s282] sm:$0xf]
        %v370 = vld [vmem:[%s282 + $0x4] sm:$0xf]
        %v371 = vld [vmem:[%s282 + $0x8] sm:$0xf]
        %v372 = vld [vmem:[%s282 + $0xc] sm:$0xf]
        %v373 = vld [vmem:[%s282 + $0x10] sm:$0xf]
        %v374 = vld [vmem:[%s282 + $0x14] sm:$0xf]
        %v375 = vld [vmem:[%s282 + $0x18] sm:$0xf]
        %v376 = vld [vmem:[%s282 + $0x1c] sm:$0xf]
        %v377 = vld [vmem:[%s282 + $0x20] sm:$0xf]
        %v378 = vld [vmem:[%s282 + $0x24] sm:$0xf]
        %v379 = vld [vmem:[%s282 + $0x28] sm:$0xf]
        %v380 = vld [vmem:[%s282 + $0x2c] sm:$0xf]
        %v381 = vld [vmem:[%s282 + $0x30] sm:$0xf]
        %v382 = vld [vmem:[%s282 + $0x34] sm:$0xf]
        %v383 = vld [vmem:[%s282 + $0x38] sm:$0xf]
        %v384 = vld [vmem:[%s282 + $0x3c] sm:$0xf]
        %v385 = vld [vmem:[#allocation6] sm:$0xf]
        %v386 = vld [vmem:[#allocation6 + $0x4] sm:$0xf]
        %v387 = vld [vmem:[#allocation6 + $0x8] sm:$0xf]
        %v388 = vld [vmem:[#allocation6 + $0xc] sm:$0xf]
        %v389 = vld [vmem:[#allocation6 + $0x10] sm:$0xf]
        %v390 = vld [vmem:[#allocation6 + $0x14] sm:$0xf]
        %v391 = vld [vmem:[#allocation6 + $0x18] sm:$0xf]
        %v392 = vld [vmem:[#allocation6 + $0x1c] sm:$0xf]
        %v393 = vld [vmem:[#allocation6 + $0x20] sm:$0xf]
        %v394 = vld [vmem:[#allocation6 + $0x24] sm:$0xf]
        %v395 = vld [vmem:[#allocation6 + $0x28] sm:$0xf]
        %v396 = vld [vmem:[#allocation6 + $0x2c] sm:$0xf]
        %v397 = vld [vmem:[#allocation6 + $0x30] sm:$0xf]
        %v398 = vld [vmem:[#allocation6 + $0x34] sm:$0xf]
        %v399 = vld [vmem:[#allocation6 + $0x38] sm:$0xf]
        %v400 = vld [vmem:[#allocation6 + $0x3c] sm:$0xf]
        %v417 = vunpack.c.l.b16 %v369
        %v418 = vunpack.c.l.b16 %v370
        %v419 = vunpack.c.l.b16 %v371
        %v420 = vunpack.c.l.b16 %v372
        %v421 = vunpack.c.l.b16 %v373
        %v422 = vunpack.c.l.b16 %v374
        %v423 = vunpack.c.l.b16 %v375
        %v424 = vunpack.c.l.b16 %v376
        %v425 = vunpack.c.l.b16 %v377
        %v426 = vunpack.c.l.b16 %v378
        %v427 = vunpack.c.l.b16 %v379
        %v428 = vunpack.c.l.b16 %v380
        %v429 = vunpack.c.l.b16 %v381
        %v430 = vunpack.c.l.b16 %v382
        %v431 = vunpack.c.l.b16 %v383
        %v432 = vunpack.c.l.b16 %v384
        %v433 = vpack.c.b16 %v418, %v417
        %v434 = vpack.c.b16 %v420, %v419
        %v435 = vpack.c.b16 %v422, %v421
        %v436 = vpack.c.b16 %v424, %v423
        %v437 = vpack.c.b16 %v426, %v425
        %v438 = vpack.c.b16 %v428, %v427
        %v439 = vpack.c.b16 %v430, %v429
        %v440 = vpack.c.b16 %v432, %v431
        %v465 = vunpack.c.l.b16 %v385
        %v466 = vunpack.c.l.b16 %v386
        %v467 = vunpack.c.l.b16 %v387
        %v468 = vunpack.c.l.b16 %v388
        %v469 = vunpack.c.l.b16 %v389
        %v470 = vunpack.c.l.b16 %v390
        %v471 = vunpack.c.l.b16 %v391
        %v472 = vunpack.c.l.b16 %v392
        %v473 = vunpack.c.l.b16 %v393
        %v474 = vunpack.c.l.b16 %v394
        %v475 = vunpack.c.l.b16 %v395
        %v476 = vunpack.c.l.b16 %v396
        %v477 = vunpack.c.l.b16 %v397
        %v478 = vunpack.c.l.b16 %v398
        %v479 = vunpack.c.l.b16 %v399
        %v480 = vunpack.c.l.b16 %v400
        %v481 = vpack.c.b16 %v466, %v465
        %v482 = vpack.c.b16 %v468, %v467
        %v483 = vpack.c.b16 %v470, %v469
        %v484 = vpack.c.b16 %v472, %v471
        %v485 = vpack.c.b16 %v474, %v473
        %v486 = vpack.c.b16 %v476, %v475
        %v487 = vpack.c.b16 %v478, %v477
        %v488 = vpack.c.b16 %v480, %v479
        %497 = vmatprep.subr.bf16.mxu0 0
        %498 = vmatpush1.bf16.msra.mxu0 %v481
        %499 = vmatprep.subr.bf16.mxu0 0
        %500 = vmatpush1.bf16.msra.mxu0 %v482
        %501 = vmatprep.subr.bf16.mxu0 0
        %502 = vmatpush1.bf16.msra.mxu0 %v483
        %503 = vmatprep.subr.bf16.mxu0 0
        %504 = vmatpush1.bf16.msra.mxu0 %v484
        %505 = vmatprep.subr.bf16.mxu0 0
        %506 = vmatpush1.bf16.msra.mxu0 %v485
        %507 = vmatprep.subr.bf16.mxu0 0
        %508 = vmatpush1.bf16.msra.mxu0 %v486
        %509 = vmatprep.subr.bf16.mxu0 0
        %510 = vmatpush1.bf16.msra.mxu0 %v487
        %511 = vmatprep.subr.bf16.mxu0 0
        %512 = vmatpush1.bf16.msra.mxu0 %v488
        %513 = vmatprep.subr.bf16.mxu0 0
        %514 = vmatpush1.bf16.msra.mxu0 0
        %515 = vmatprep.subr.bf16.mxu0 0
        %516 = vmatpush1.bf16.msra.mxu0 0
        %517 = vmatprep.subr.bf16.mxu0 0
        %518 = vmatpush1.bf16.msra.mxu0 0
        %519 = vmatprep.subr.bf16.mxu0 0
        %520 = vmatpush1.bf16.msra.mxu0 0
        %521 = vmatprep.subr.bf16.mxu0 0
        %522 = vmatpush1.bf16.msra.mxu0 0
        %523 = vmatprep.subr.bf16.mxu0 0
        %524 = vmatpush1.bf16.msra.mxu0 0
        %525 = vmatprep.subr.bf16.mxu0 0
        %526 = vmatpush1.bf16.msra.mxu0 0
        %527 = vmatprep.subr.bf16.mxu0 0
        %528 = vmatpush1.bf16.msra.mxu0 0
        %529 = vmatprep.mubr.bf16.mxu0 0
        %530 = vmatmul.mubr.bf16.gmra.mrb[0].mxu0 %v433
        %v531 = vpop.f32.mrb[0].mxu0
        %v532 = vadd.f32 0.0, %v531
        %v533 = vpop.f32.mrb[0].mxu0
        %v534 = vpop.f32.mrb[0].mxu0
        %v535 = vadd.f32 0.0, %v534
        %v536 = vpop.f32.mrb[0].mxu0
        %537 = vmatprep.mubr.bf16.mxu0 0
        %538 = vmatmul.mubr.bf16.gmra.mrb[0].mxu0 %v434
        %v539 = vpop.f32.mrb[0].mxu0
        %v540 = vadd.f32 0.0, %v539
        %v541 = vpop.f32.mrb[0].mxu0
        %v542 = vpop.f32.mrb[0].mxu0
        %v543 = vadd.f32 0.0, %v542
        %v544 = vpop.f32.mrb[0].mxu0
        %545 = vmatprep.mubr.bf16.mxu0 0
        %546 = vmatmul.mubr.bf16.gmra.mrb[0].mxu0 %v435
        %v547 = vpop.f32.mrb[0].mxu0
        %v548 = vadd.f32 0.0, %v547
        %v549 = vpop.f32.mrb[0].mxu0
        %v550 = vpop.f32.mrb[0].mxu0
        %v551 = vadd.f32 0.0, %v550
        %v552 = vpop.f32.mrb[0].mxu0
        %553 = vmatprep.mubr.bf16.mxu0 0
        %554 = vmatmul.mubr.bf16.gmra.mrb[0].mxu0 %v436
        %v555 = vpop.f32.mrb[0].mxu0
        %v556 = vadd.f32 0.0, %v555
        %v557 = vpop.f32.mrb[0].mxu0
        %v558 = vpop.f32.mrb[0].mxu0
        %v559 = vadd.f32 0.0, %v558
        %v560 = vpop.f32.mrb[0].mxu0
        %561 = vmatprep.mubr.bf16.mxu0 0
        %562 = vmatmul.mubr.bf16.gmra.mrb[0].mxu0 %v437
        %v563 = vpop.f32.mrb[0].mxu0
        %v564 = vadd.f32 0.0, %v563
        %v565 = vpop.f32.mrb[0].mxu0
        %v566 = vpop.f32.mrb[0].mxu0
        %v567 = vadd.f32 0.0, %v566
        %v568 = vpop.f32.mrb[0].mxu0
        %569 = vmatprep.mubr.bf16.mxu0 0
        %570 = vmatmul.mubr.bf16.gmra.mrb[0].mxu0 %v438
        %v571 = vpop.f32.mrb[0].mxu0
        %v572 = vadd.f32 0.0, %v571
        %v573 = vpop.f32.mrb[0].mxu0
        %v574 = vpop.f32.mrb[0].mxu0
        %v575 = vadd.f32 0.0, %v574
        %v576 = vpop.f32.mrb[0].mxu0
        %577 = vmatprep.mubr.bf16.mxu0 0
        %578 = vmatmul.mubr.bf16.gmra.mrb[0].mxu0 %v439
        %v579 = vpop.f32.mrb[0].mxu0
        %v580 = vadd.f32 0.0, %v579
        %v581 = vpop.f32.mrb[0].mxu0
        %v582 = vpop.f32.mrb[0].mxu0
        %v583 = vadd.f32 0.0, %v582
        %v584 = vpop.f32.mrb[0].mxu0
        %585 = vmatprep.mubr.bf16.mxu0 0
        %586 = vmatmul.mubr.bf16.gmra.mrb[0].mxu0 %v440
        %v587 = vpop.f32.mrb[0].mxu0
        %v588 = vadd.f32 0.0, %v587
        %v589 = vpop.f32.mrb[0].mxu0
        %v590 = vpop.f32.mrb[0].mxu0
        %v591 = vadd.f32 0.0, %v590
        %v592 = vpop.f32.mrb[0].mxu0
        %593 = vdwg.mxu0
        %v594 = vadd.f32 %v353, %v532
        %v595 = vadd.f32 %v354, %v535
        %v596 = vadd.f32 %v355, %v540
        %v597 = vadd.f32 %v356, %v543
        %v598 = vadd.f32 %v357, %v548
        %v599 = vadd.f32 %v358, %v551
        %v600 = vadd.f32 %v359, %v556
        %v601 = vadd.f32 %v360, %v559
        %v602 = vadd.f32 %v361, %v564
        %v603 = vadd.f32 %v362, %v567
        %v604 = vadd.f32 %v363, %v572
        %v605 = vadd.f32 %v364, %v575
        %v606 = vadd.f32 %v365, %v580
        %v607 = vadd.f32 %v366, %v583
        %v608 = vadd.f32 %v367, %v588
        %v609 = vadd.f32 %v368, %v591
        %610 = vst [vmem:[#allocation2] sm:$0xff] %v594
        %611 = vst [vmem:[#allocation2 + $0x8] sm:$0xff] %v595
        %612 = vst [vmem:[#allocation2 + $0x10] sm:$0xff] %v596
        %613 = vst [vmem:[#allocation2 + $0x18] sm:$0xff] %v597
        %614 = vst [vmem:[#allocation2 + $0x20] sm:$0xff] %v598
        %615 = vst [vmem:[#allocation2 + $0x28] sm:$0xff] %v599
        %616 = vst [vmem:[#allocation2 + $0x30] sm:$0xff] %v600
        %617 = vst [vmem:[#allocation2 + $0x38] sm:$0xff] %v601
        %618 = vst [vmem:[#allocation2 + $0x40] sm:$0xff] %v602
        %619 = vst [vmem:[#allocation2 + $0x48] sm:$0xff] %v603
        %620 = vst [vmem:[#allocation2 + $0x50] sm:$0xff] %v604
        %621 = vst [vmem:[#allocation2 + $0x58] sm:$0xff] %v605
        %622 = vst [vmem:[#allocation2 + $0x60] sm:$0xff] %v606
        %623 = vst [vmem:[#allocation2 + $0x68] sm:$0xff] %v607
        %624 = vst [vmem:[#allocation2 + $0x70] sm:$0xff] %v608
        %625 = vst [vmem:[#allocation2 + $0x78] sm:$0xff] %v609
        // Predicated region
        $region45: #{tpu_custom_call.1} parent=31 // pred_check
          %p626 = pneg %p333
        $region46: #{tpu_custom_call.1} parent=31 // pred_check_branch
          %628 = sbr.rel (%p626) target = $region48
        $region47: #{tpu_custom_call.1} parent=31 // pred_region
          %v629 = vld [vmem:[#allocation2] sm:$0xff]
          %v630 = vld [vmem:[#allocation2 + $0x8] sm:$0xff]
          %v631 = vld [vmem:[#allocation2 + $0x10] sm:$0xff]
          %v632 = vld [vmem:[#allocation2 + $0x18] sm:$0xff]
          %v633 = vld [vmem:[#allocation2 + $0x20] sm:$0xff]
          %v634 = vld [vmem:[#allocation2 + $0x28] sm:$0xff]
          %v635 = vld [vmem:[#allocation2 + $0x30] sm:$0xff]
          %v636 = vld [vmem:[#allocation2 + $0x38] sm:$0xff]
          %v637 = vld [vmem:[#allocation2 + $0x40] sm:$0xff]
          %v638 = vld [vmem:[#allocation2 + $0x48] sm:$0xff]
          %v639 = vld [vmem:[#allocation2 + $0x50] sm:$0xff]
          %v640 = vld [vmem:[#allocation2 + $0x58] sm:$0xff]
          %v641 = vld [vmem:[#allocation2 + $0x60] sm:$0xff]
          %v642 = vld [vmem:[#allocation2 + $0x68] sm:$0xff]
          %v643 = vld [vmem:[#allocation2 + $0x70] sm:$0xff]
          %v644 = vld [vmem:[#allocation2 + $0x78] sm:$0xff]
          %v645 = vld [vmem:[%s330] sm:$0x1]
          %v647 = vlaneseq
          %v648 = vshrl.u32 %v647, 7
          %v649 = vsub.s32 0, %v648
          %v650 = vrot.slane %v645, %v649
          %v652 = vadd.f32 %v629, %v650
          %v653 = vadd.f32 %v630, %v650
          %v654 = vadd.f32 %v631, %v650
          %v655 = vadd.f32 %v632, %v650
          %v656 = vadd.f32 %v633, %v650
          %v657 = vadd.f32 %v634, %v650
          %v658 = vadd.f32 %v635, %v650
          %v659 = vadd.f32 %v636, %v650
          %v660 = vadd.f32 %v637, %v650
          %v661 = vadd.f32 %v638, %v650
          %v662 = vadd.f32 %v639, %v650
          %v663 = vadd.f32 %v640, %v650
          %v664 = vadd.f32 %v641, %v650
          %v665 = vadd.f32 %v642, %v650
          %v666 = vadd.f32 %v643, %v650
          %v667 = vadd.f32 %v644, %v650
          %v668 = vadd.f32 %v652, %v653
          %v669 = vadd.f32 %v668, %v654
          %v670 = vadd.f32 %v669, %v655
          %v671 = vadd.f32 %v670, %v656
          %v672 = vadd.f32 %v671, %v657
          %v673 = vadd.f32 %v672, %v658
          %v674 = vadd.f32 %v673, %v659
          %v675 = vadd.f32 %v674, %v660
          %v676 = vadd.f32 %v675, %v661
          %v677 = vadd.f32 %v676, %v662
          %v678 = vadd.f32 %v677, %v663
          %v679 = vadd.f32 %v678, %v664
          %v680 = vadd.f32 %v679, %v665
          %v681 = vadd.f32 %v680, %v666
          %v682 = vadd.f32 %v681, %v667
          %v683 = vrot.slane %v682, 4
          %v684 = vadd.f32 %v682, %v683
          %v685 = vrot.slane %v684, 2
          %v686 = vadd.f32 %v684, %v685
          %v687 = vrot.slane %v686, 1
          %v688 = vadd.f32 %v686, %v687
          %689 = vst [vmem:[%s318] sm:$0xff] %v688
          %v690 = vmul.f32 %v652, %v652
          %v691 = vmul.f32 %v653, %v653
          %v692 = vmul.f32 %v654, %v654
          %v693 = vmul.f32 %v655, %v655
          %v694 = vmul.f32 %v656, %v656
          %v695 = vmul.f32 %v657, %v657
          %v696 = vmul.f32 %v658, %v658
          %v697 = vmul.f32 %v659, %v659
          %v698 = vmul.f32 %v660, %v660
          %v699 = vmul.f32 %v661, %v661
          %v700 = vmul.f32 %v662, %v662
          %v701 = vmul.f32 %v663, %v663
          %v702 = vmul.f32 %v664, %v664
          %v703 = vmul.f32 %v665, %v665
          %v704 = vmul.f32 %v666, %v666
          %v705 = vmul.f32 %v667, %v667
          %v706 = vadd.f32 %v690, %v691
          %v707 = vadd.f32 %v706, %v692
          %v708 = vadd.f32 %v707, %v693
          %v709 = vadd.f32 %v708, %v694
          %v710 = vadd.f32 %v709, %v695
          %v711 = vadd.f32 %v710, %v696
          %v712 = vadd.f32 %v711, %v697
          %v713 = vadd.f32 %v712, %v698
          %v714 = vadd.f32 %v713, %v699
          %v715 = vadd.f32 %v714, %v700
          %v716 = vadd.f32 %v715, %v701
          %v717 = vadd.f32 %v716, %v702
          %v718 = vadd.f32 %v717, %v703
          %v719 = vadd.f32 %v718, %v704
          %v720 = vadd.f32 %v719, %v705
          %v721 = vrot.slane %v720, 4
          %v722 = vadd.f32 %v720, %v721
          %v723 = vrot.slane %v722, 2
          %v724 = vadd.f32 %v722, %v723
          %v725 = vrot.slane %v724, 1
          %v726 = vadd.f32 %v724, %v725
          %727 = vst [vmem:[%s325] sm:$0xff] %v726
          %728 = vst [vmem:[%s311] sm:$0xff] %v652
          %729 = vst [vmem:[%s311 + $0x8] sm:$0xff] %v653
          %730 = vst [vmem:[%s311 + $0x10] sm:$0xff] %v654
          %731 = vst [vmem:[%s311 + $0x18] sm:$0xff] %v655
          %732 = vst [vmem:[%s311 + $0x20] sm:$0xff] %v656
          %733 = vst [vmem:[%s311 + $0x28] sm:$0xff] %v657
          %734 = vst [vmem:[%s311 + $0x30] sm:$0xff] %v658
          %735 = vst [vmem:[%s311 + $0x38] sm:$0xff] %v659
          %736 = vst [vmem:[%s311 + $0x40] sm:$0xff] %v660
          %737 = vst [vmem:[%s311 + $0x48] sm:$0xff] %v661
          %738 = vst [vmem:[%s311 + $0x50] sm:$0xff] %v662
          %739 = vst [vmem:[%s311 + $0x58] sm:$0xff] %v663
          %740 = vst [vmem:[%s311 + $0x60] sm:$0xff] %v664
          %741 = vst [vmem:[%s311 + $0x68] sm:$0xff] %v665
          %742 = vst [vmem:[%s311 + $0x70] sm:$0xff] %v666
          %743 = vst [vmem:[%s311 + $0x78] sm:$0xff] %v667
        $region48: #{tpu_custom_call.1} parent=31 // pred_fallthru
          _
        %s744 = sand.u32 %s138, 1
        %s745 = scalar_lea.sflag [#allocation5], %s744
        %s746 = sand.u32 %s138, 1
        %s747 = smul.addr %s746, 128
        %s748 = scalar_lea.vmem [#allocation8], %s747
        %s749 = sand.u32 %s27, 1
        %s750 = scalar_lea.sflag [#allocation10], %s749
        %s751 = sand.u32 %s166, 1
        %s752 = smul.addr %s751, 8
        %s753 = scalar_lea.vmem [#allocation9], %s752
        %s754 = sand.u32 %s27, 1
        %s755 = scalar_lea.sflag [#allocation10], %s754
        %s756 = sand.u32 %s194, 1
        %s757 = smul.addr %s756, 8
        %s758 = scalar_lea.vmem [#allocation11], %s757
        // Predicated region
        $region49: #{tpu_custom_call.1} parent=31 // pred_check
          %p759 = pneg %p148
        $region50: #{tpu_custom_call.1} parent=31 // pred_check_branch
          %761 = sbr.rel (%p759) target = $region52
        $region51: #{tpu_custom_call.1} parent=31 // pred_region
          %s762 = smul.u32 16, %s32
          %s764 = ssub.s32 2048, 2048
          %765 = vsyncadd %s745, %s764
          %s766 = sadd.s32 %s33, %s762
          %s767 = smul.addr %s766, 128
          %s768 = scalar_lea.hbm %s3, %s767
          %s769 = sshll.u32 %s748, 4
          %s770 = int_to_ptr.vmem [resolvable:$true] %s769
          %775 = dma.vmem_to_hbm [thread:$0]  %s770, 2048, %s768, %s745, 128, 128, 8
        $region52: #{tpu_custom_call.1} parent=31 // pred_fallthru
          _
        // Predicated region
        $region53: #{tpu_custom_call.1} parent=31 // pred_check
          %p776 = pneg %p176
        $region54: #{tpu_custom_call.1} parent=31 // pred_check_branch
          %778 = sbr.rel (%p776) target = $region56
        $region55: #{tpu_custom_call.1} parent=31 // pred_region
          %s780 = ssub.s32 128, 128
          %781 = vsyncadd %s750, %s780
          %s782 = sadd.s32 %s33, %s32
          %s783 = smul.addr %s782, 128
          %s784 = scalar_lea.hbm %s4, %s783
          %s786 = sshll.u32 %s753, 4
          %s787 = int_to_ptr.vmem [resolvable:$true] %s786
          %789 = dma.vmem_to_hbm [thread:$0]  %s787, 128, %s784, %s750
        $region56: #{tpu_custom_call.1} parent=31 // pred_fallthru
          _
        // Predicated region
        $region57: #{tpu_custom_call.1} parent=31 // pred_check
          %p790 = pneg %p204
        $region58: #{tpu_custom_call.1} parent=31 // pred_check_branch
          %792 = sbr.rel (%p790) target = $region60
        $region59: #{tpu_custom_call.1} parent=31 // pred_region
          %s794 = ssub.s32 128, 128
          %795 = vsyncadd %s755, %s794
          %s796 = sadd.s32 %s33, %s32
          %s797 = smul.addr %s796, 128
          %s798 = scalar_lea.hbm %s5, %s797
          %s800 = sshll.u32 %s758, 4
          %s801 = int_to_ptr.vmem [resolvable:$true] %s800
          %803 = dma.vmem_to_hbm [thread:$0]  %s801, 128, %s798, %s755
        $region60: #{tpu_custom_call.1} parent=31 // pred_fallthru
          _
      $region32: #{tpu_custom_call.1} parent=5 // pred_fallthru
        _
      %p804 = scmp.le.s32.totalorder 2, %s22
      // Predicated region
      $region61: #{tpu_custom_call.1} parent=5 // pred_check
        %p805 = pneg %p804
      $region62: #{tpu_custom_call.1} parent=5 // pred_check_branch
        %807 = sbr.rel (%p805) target = $region64
      $region63: #{tpu_custom_call.1} parent=5 // pred_region
        %s808 = ssub.s32 %s22, 2
        // Predicated region
        $region65: #{tpu_custom_call.1} parent=63 // pred_check
          %p809 = pneg %p154
        $region66: #{tpu_custom_call.1} parent=63 // pred_check_branch
          %811 = sbr.rel (%p809) target = $region68
        $region67: #{tpu_custom_call.1} parent=63 // pred_region
          %s812 = sand.u32 %s139, 1
          %s813 = scalar_lea.sflag [#allocation5], %s812
          %s814 = sand.u32 %s139, 1
          %s815 = smul.addr %s814, 128
          %s816 = scalar_lea.vmem [#allocation8], %s815
          %817 = dma.done %s813, 2048
        $region68: #{tpu_custom_call.1} parent=63 // pred_fallthru
          _
        // Predicated region
        $region69: #{tpu_custom_call.1} parent=63 // pred_check
          %p818 = pneg %p182
        $region70: #{tpu_custom_call.1} parent=63 // pred_check_branch
          %820 = sbr.rel (%p818) target = $region72
        $region71: #{tpu_custom_call.1} parent=63 // pred_region
          %s821 = sand.u32 %s28, 1
          %s822 = scalar_lea.sflag [#allocation10], %s821
          %s823 = sand.u32 %s167, 1
          %s824 = smul.addr %s823, 8
          %s825 = scalar_lea.vmem [#allocation9], %s824
          %826 = dma.done %s822, 128
        $region72: #{tpu_custom_call.1} parent=63 // pred_fallthru
          _
        // Predicated region
        $region73: #{tpu_custom_call.1} parent=63 // pred_check
          %p827 = pneg %p210
        $region74: #{tpu_custom_call.1} parent=63 // pred_check_branch
          %829 = sbr.rel (%p827) target = $region76
        $region75: #{tpu_custom_call.1} parent=63 // pred_region
          %s830 = sand.u32 %s28, 1
          %s831 = scalar_lea.sflag [#allocation10], %s830
          %s832 = sand.u32 %s195, 1
          %s833 = smul.addr %s832, 8
          %s834 = scalar_lea.vmem [#allocation11], %s833
          %835 = dma.done %s831, 128
        $region76: #{tpu_custom_call.1} parent=63 // pred_fallthru
          _
      $region64: #{tpu_custom_call.1} parent=5 // pred_fallthru
        _
    $region6: #{tpu_custom_call.1} parent=1 // loop_footer
      %s26 = sadd.s32 1, %s22
    $region7: #{tpu_custom_call.1} parent=1 // loop_footer_branch
      %21 = sbr.rel target = $region3
    $region8: #{tpu_custom_call.1} parent=1 // loop_exit
      _
    %836 = vsyncpa [#allocation4], 1
    %s837 = scalar_lea.sflag [#allocation4], 1
    %838 = vsyncpa %s837, 1
    %839 = vsyncpa [#allocation7], 1
    %840 = vsyncpa [#allocation5], 1
    %s841 = scalar_lea.sflag [#allocation5], 1
    %842 = vsyncpa %s841, 1
    %843 = vsyncpa [#allocation10], 1
    %s844 = scalar_lea.sflag [#allocation10], 1
    %845 = vsyncpa %s844, 1

</llo_original>
